<compile_context>
chip_gen: v7x
topology: tpu7x:2x2x1
jax: 0.10.0
libtpu: 0.0.40
codegen_flags: <defaults>
</compile_context>

<pallas_src>
import jax
import jax.numpy as jnp
from jax.experimental import pallas as pl
from jax.experimental.pallas import tpu as pltpu


def _lstm_fused_kernel(x_ref, wih_ref, whh_ref, b_ref, wout_ref, bout_ref,
                       out_ref, xw_ref):
    """Whole LSTM recurrence + final linear in one invocation.

    x_ref   : (T*Bp, I)  time-major rows, batch padded to Bp (multiple of 8)
    wih_ref : (I, 4H)    fused input weights, gate order [i|f|o|g],
                         i/f/o columns pre-scaled by 0.5 (tanh-sigmoid trick)
    whh_ref : (H, 4H)    fused recurrent weights (same pre-scale)
    b_ref   : (1, 4H)    fused combined bias b_ih + b_hh (same pre-scale)
    wout_ref: (1, H)     output linear weight (row vector)
    bout_ref: (1,)       output linear bias (SMEM scalar)
    out_ref : (1, Bp)    lane-dense output row (batch on lanes)
    xw_ref  : (T*Bp, 4H) VMEM scratch: x @ W_ih + b for all timesteps
    """
    Bp = out_ref.shape[1]
    T = x_ref.shape[0] // Bp
    H = wout_ref.shape[1]
    G = 4 * H

    # --- Prologue: hoist the input projection out of the serial recurrence.
    # One (T*Bp, I) @ (I, 4H) MXU matmul + one bias broadcast.
    xw_ref[...] = (jnp.dot(x_ref[...], wih_ref[...],
                           preferred_element_type=jnp.float32)
                   + b_ref[...])

    w_hh = whh_ref[...]  # (H, 4H), resident for the whole recurrence

    # Loop-invariant per-lane affine turning the full-width tanh back into a
    # sigmoid on the i/f/o lanes (sigmoid(x) = 0.5*tanh(x/2) + 0.5, the /2 is
    # already folded into weights/bias); identity on the g lanes.
    col = jax.lax.broadcasted_iota(jnp.int32, (1, G), 1)
    is_ifo = col < 3 * H
    act_scale = jnp.where(is_ifo, 0.5, 1.0).astype(jnp.float32)
    act_shift = jnp.where(is_ifo, 0.5, 0.0).astype(jnp.float32)

    def step(t, carry):
        h, c = carry
        row0 = pl.multiple_of(t * Bp, 8)  # sublane-aligned dynamic slice
        # Only truly serial work per step: one fused-gate MXU pass.
        gates = (xw_ref[pl.ds(row0, Bp), :]
                 + jnp.dot(h, w_hh, preferred_element_type=jnp.float32))
        # ONE full-width (Bp, 4H) EUP call instead of sigmoid(3H)+tanh(H).
        act = jnp.tanh(gates) * act_scale + act_shift   # [i | f | o | g]
        i_g = act[:, 0 * H:1 * H]
        f_g = act[:, 1 * H:2 * H]
        o_g = act[:, 2 * H:3 * H]
        g_g = act[:, 3 * H:4 * H]
        c_new = f_g * c + i_g * g_g
        h_new = o_g * jnp.tanh(c_new)
        return h_new, c_new

    h0 = jnp.zeros((Bp, H), jnp.float32)
    c0 = jnp.zeros((Bp, H), jnp.float32)
    h_T, _ = jax.lax.fori_loop(0, T, step, (h0, c0), unroll=True)

    # --- Final Linear(H, 1), written lane-dense as a (1, Bp) row:
    # (1, H) x (Bp, H) contraction over H (A @ B^T pattern).
    out_row = jax.lax.dot_general(
        wout_ref[...], h_T, (((1,), (1,)), ((), ())),
        preferred_element_type=jnp.float32)              # (1, Bp)
    out_ref[...] = (out_row + bout_ref[0]).astype(out_ref.dtype)


_IFOG = (0, 1, 3, 2)  # PyTorch gate order (i, f, g, o) -> fused (i, f, o, g)


def _fuse_params(w_ih, w_hh, b, w_out):
    """Reorder/concatenate per-gate params into the fused kernel layout.

    Also folds the 0.5 pre-scale of the single-tanh sigmoid trick into the
    i/f/o columns of W_ih, W_hh and the combined bias (zero runtime cost).
    """
    H = w_hh.shape[-1]
    w_ih_f = jnp.concatenate([w_ih[g] for g in _IFOG], axis=-1)      # (I, 4H)
    w_hh_f = jnp.concatenate([w_hh[g] for g in _IFOG], axis=-1)      # (H, 4H)
    b_f = jnp.concatenate([b[g] for g in _IFOG], axis=-1)[None, :]   # (1, 4H)
    col_scale = jnp.concatenate(
        [jnp.full((3 * H,), 0.5, jnp.float32), jnp.ones((H,), jnp.float32)])
    w_ih_f = w_ih_f * col_scale
    w_hh_f = w_hh_f * col_scale
    b_f = b_f * col_scale
    w_out_row = w_out.T                                              # (1, H)
    return w_ih_f, w_hh_f, b_f, w_out_row


@jax.jit
def lstm_model_forward(x, w_ih, w_hh, b, w_out, b_out):
    """x: (B, T, I) f32.  Returns (B, 1) f32, matching LSTMModel.forward."""
    B, T, I = x.shape
    H = w_hh.shape[-1]

    w_ih_f, w_hh_f, b_f, w_out_row = _fuse_params(w_ih, w_hh, b, w_out)

    # Pad batch up to a full sublane group (8) so vreg work is unmasked.
    Bp = max(8, ((B + 7) // 8) * 8)
    x_tm = jnp.swapaxes(x, 0, 1)                                # (T, B, I)
    x_tm = jnp.pad(x_tm, ((0, 0), (0, Bp - B), (0, 0)))         # (T, Bp, I)
    x_flat = x_tm.reshape(T * Bp, I)                            # time-major

    # Advisory cost estimate (latency-bound kernel; helps XLA overlap it).
    flops = (2 * T * Bp * I * 4 * H                 # input projection
             + T * 2 * Bp * H * 4 * H               # per-step recurrent matmul
             + T * (2 * Bp * 4 * H + 5 * Bp * H)    # gate elementwise
             + 2 * Bp * H)                          # output linear
    transcendentals = T * Bp * 5 * H                # tanh(4H) + tanh(H)/step
    bytes_accessed = 4 * (x_flat.size + w_ih_f.size + w_hh_f.size
                          + b_f.size + w_out_row.size + b_out.size + Bp)

    # Explicit VMEM cap sized from the actual buffers (lane-padded x + xw
    # scratch + weights) with headroom; fits v5e's 16 MiB default and stays
    # well under v7x's 64 MiB physical at these shapes.
    vmem_bytes = 4 * (T * Bp * max(I, 128)          # x, lane-padded to 128
                      + T * Bp * 4 * H              # xw scratch
                      + (I + H + 1) * 4 * H + H + Bp)
    vmem_limit = int(min(max(4 * vmem_bytes, 16 << 20), 48 << 20))

    out_row = pl.pallas_call(
        _lstm_fused_kernel,
        out_shape=jax.ShapeDtypeStruct((1, Bp), jnp.float32),
        in_specs=[
            pl.BlockSpec(memory_space=pltpu.MemorySpace.VMEM),  # x_flat
            pl.BlockSpec(memory_space=pltpu.MemorySpace.VMEM),  # w_ih fused
            pl.BlockSpec(memory_space=pltpu.MemorySpace.VMEM),  # w_hh fused
            pl.BlockSpec(memory_space=pltpu.MemorySpace.VMEM),  # bias fused
            pl.BlockSpec(memory_space=pltpu.MemorySpace.VMEM),  # w_out row
            pl.BlockSpec(memory_space=pltpu.MemorySpace.SMEM),  # b_out scalar
        ],
        out_specs=pl.BlockSpec(memory_space=pltpu.MemorySpace.VMEM),
        scratch_shapes=[pltpu.VMEM((T * Bp, 4 * H), jnp.float32)],  # xW + b
        compiler_params=pltpu.CompilerParams(vmem_limit_bytes=vmem_limit),
        cost_estimate=pl.CostEstimate(flops=flops,
                                      transcendentals=transcendentals,
                                      bytes_accessed=bytes_accessed),
    )(x_flat, w_ih_f, w_hh_f, b_f, w_out_row, b_out)

    return out_row[0, :B][:, None]                              # (B, 1)


def lstm_model_reference(x, w_ih, w_hh, b, w_out, b_out):
    """Pure-JAX reference matching PyTorch LSTM(batch_first) + Linear."""
    B, T, I = x.shape
    H = w_hh.shape[-1]

    def step(carry, x_t):
        h, c = carry

        def gate(k):
            return x_t @ w_ih[k] + h @ w_hh[k] + b[k]

        i = jax.nn.sigmoid(gate(0))
        f = jax.nn.sigmoid(gate(1))
        g = jnp.tanh(gate(2))
        o = jax.nn.sigmoid(gate(3))
        c = f * c + i * g
        h = o * jnp.tanh(c)
        return (h, c), None

    h0 = jnp.zeros((B, H), jnp.float32)
    c0 = jnp.zeros((B, H), jnp.float32)
    (h_T, _), _ = jax.lax.scan(step, (h0, c0), jnp.swapaxes(x, 0, 1))
    return h_T @ w_out + b_out


def init_params(key, input_size, hidden_size):
    """Deterministic init mimicking PyTorch's U(-1/sqrt(H), 1/sqrt(H))."""
    k = 1.0 / jnp.sqrt(hidden_size)
    ks = jax.random.split(key, 6)
    w_ih = jax.random.uniform(ks[0], (4, input_size, hidden_size),
                              jnp.float32, -k, k)
    w_hh = jax.random.uniform(ks[1], (4, hidden_size, hidden_size),
                              jnp.float32, -k, k)
    b_ih = jax.random.uniform(ks[2], (4, hidden_size), jnp.float32, -k, k)
    b_hh = jax.random.uniform(ks[3], (4, hidden_size), jnp.float32, -k, k)
    b = b_ih + b_hh                     # combined bias (identical math)
    w_out = jax.random.uniform(ks[4], (hidden_size, 1), jnp.float32, -k, k)
    b_out = jax.random.uniform(ks[5], (1,), jnp.float32, -k, k)
    return w_ih, w_hh, b, w_out, b_out


if __name__ == "__main__":
    B, T, I, H = 2, 8, 4, 32   # small shapes consistent with the module

    key = jax.random.PRNGKey(0)
    k_x, k_p = jax.random.split(key)
    x = jax.random.normal(k_x, (B, T, I), jnp.float32)
    w_ih, w_hh, b, w_out, b_out = init_params(k_p, I, H)

    out = lstm_model_forward(x, w_ih, w_hh, b, w_out, b_out)
    out = jax.block_until_ready(out)

    ref = lstm_model_reference(x, w_ih, w_hh, b, w_out, b_out)
    assert out.shape == (B, 1)
    assert jnp.allclose(out, ref, rtol=2e-4, atol=2e-5), (out, ref)

    print("KERNEL_OK")
</pallas_src>

<mosaic_0001>
module attributes {stable_mosaic.version = 11 : i64} {
  func.func @_lstm_fused_kernel(%arg0: memref<64x4xf32, #tpu.memory_space<vmem>>, %arg1: memref<4x128xf32, #tpu.memory_space<vmem>>, %arg2: memref<32x128xf32, #tpu.memory_space<vmem>>, %arg3: memref<1x128xf32, #tpu.memory_space<vmem>>, %arg4: memref<1x32xf32, #tpu.memory_space<vmem>>, %arg5: memref<1xf32, #tpu.memory_space<smem>>, %arg6: memref<1x8xf32, #tpu.memory_space<vmem>>, %arg7: memref<64x128xf32, #tpu.memory_space<vmem>>) attributes {dimension_semantics = [], scalar_prefetch = 0 : i64, scratch_operands = 1 : i64, tpu.core_type = #tpu.core_type<tc>} {
    %c0 = arith.constant 0 : index
    %c0_0 = arith.constant 0 : index
    %0 = vector.load %arg0[%c0, %c0_0] : memref<64x4xf32, #tpu.memory_space<vmem>>, vector<64x4xf32>
    %c0_1 = arith.constant 0 : index
    %c0_2 = arith.constant 0 : index
    %1 = vector.load %arg1[%c0_1, %c0_2] : memref<4x128xf32, #tpu.memory_space<vmem>>, vector<4x128xf32>
    %cst = arith.constant dense<0.000000e+00> : vector<64x128xf32>
    %2 = tpu.matmul %0, %1, %cst {dimension_numbers = #tpu.dot_dimension_numbers<[1], [0], [0], [1], [0, 0, 1, 1], [], []>} : vector<64x4xf32>, vector<4x128xf32>, vector<64x128xf32> -> vector<64x128xf32>
    %c0_3 = arith.constant 0 : index
    %c0_4 = arith.constant 0 : index
    %3 = vector.load %arg3[%c0_3, %c0_4] : memref<1x128xf32, #tpu.memory_space<vmem>>, vector<1x128xf32>
    %4 = vector.broadcast %3 : vector<1x128xf32> to vector<64x128xf32>
    %5 = arith.addf %2, %4 : vector<64x128xf32>
    %c0_5 = arith.constant 0 : index
    %c0_6 = arith.constant 0 : index
    %6 = vector.load %arg7[%c0_5, %c0_6] : memref<64x128xf32, #tpu.memory_space<vmem>>, vector<64x128xf32>
    tpu.vector_store %arg7[%c0_5, %c0_6], %5 {strides = array<i32>} : memref<64x128xf32, #tpu.memory_space<vmem>>, vector<64x128xf32>,
    %c0_7 = arith.constant 0 : index
    %c0_8 = arith.constant 0 : index
    %7 = vector.load %arg2[%c0_7, %c0_8] : memref<32x128xf32, #tpu.memory_space<vmem>>, vector<32x128xf32>
    %8 = tpu.iota {dimensions = array<i32: 1>} : vector<1x128xi32>
    %c96_i32 = arith.constant 96 : i32
    %9 = vector.broadcast %c96_i32 : i32 to vector<1x128xi32>
    %10 = arith.cmpi slt, %8, %9 : vector<1x128xi32>
    %cst_9 = arith.constant 5.000000e-01 : f32
    %cst_10 = arith.constant 1.000000e+00 : f32
    %11 = vector.broadcast %cst_9 : f32 to vector<1x128xf32>
    %12 = vector.broadcast %cst_10 : f32 to vector<1x128xf32>
    %13 = arith.select %10, %11, %12 : vector<1x128xi1>, vector<1x128xf32>
    %cst_11 = arith.constant 5.000000e-01 : f32
    %cst_12 = arith.constant 0.000000e+00 : f32
    %14 = vector.broadcast %cst_11 : f32 to vector<1x128xf32>
    %15 = vector.broadcast %cst_12 : f32 to vector<1x128xf32>
    %16 = arith.select %10, %14, %15 : vector<1x128xi1>, vector<1x128xf32>
    %cst_13 = arith.constant 0.000000e+00 : f32
    %17 = vector.broadcast %cst_13 : f32 to vector<8x32xf32>
    %cst_14 = arith.constant 0.000000e+00 : f32
    %18 = vector.broadcast %cst_14 : f32 to vector<8x32xf32>
    %c0_i32 = arith.constant 0 : i32
    %c8_i32 = arith.constant 8 : i32
    %19 = arith.muli %c0_i32, %c8_i32 : i32
    %20 = tpu.assume_multiple %19, 8 : i32
    %21 = arith.index_cast %20 : i32 to index
    %c0_15 = arith.constant 0 : index
    %22 = vector.load %arg7[%21, %c0_15] : memref<64x128xf32, #tpu.memory_space<vmem>>, vector<8x128xf32>
    %cst_16 = arith.constant dense<0.000000e+00> : vector<8x128xf32>
    %23 = tpu.matmul %17, %7, %cst_16 {dimension_numbers = #tpu.dot_dimension_numbers<[1], [0], [0], [1], [0, 0, 1, 1], [], []>} : vector<8x32xf32>, vector<32x128xf32>, vector<8x128xf32> -> vector<8x128xf32>
    %24 = arith.addf %22, %23 : vector<8x128xf32>
    %25 = math.tanh %24 : vector<8x128xf32>
    %26 = vector.broadcast %13 : vector<1x128xf32> to vector<8x128xf32>
    %27 = arith.mulf %25, %26 : vector<8x128xf32>
    %28 = vector.broadcast %16 : vector<1x128xf32> to vector<8x128xf32>
    %29 = arith.addf %27, %28 : vector<8x128xf32>
    %30 = vector.extract_strided_slice %29 {offsets = [0, 0], sizes = [8, 32], strides = [1, 1]} : vector<8x128xf32> to vector<8x32xf32>
    %31 = vector.extract_strided_slice %29 {offsets = [0, 32], sizes = [8, 32], strides = [1, 1]} : vector<8x128xf32> to vector<8x32xf32>
    %32 = vector.extract_strided_slice %29 {offsets = [0, 64], sizes = [8, 32], strides = [1, 1]} : vector<8x128xf32> to vector<8x32xf32>
    %33 = vector.extract_strided_slice %29 {offsets = [0, 96], sizes = [8, 32], strides = [1, 1]} : vector<8x128xf32> to vector<8x32xf32>
    %34 = arith.mulf %31, %18 : vector<8x32xf32>
    %35 = arith.mulf %30, %33 : vector<8x32xf32>
    %36 = arith.addf %34, %35 : vector<8x32xf32>
    %37 = math.tanh %36 : vector<8x32xf32>
    %38 = arith.mulf %32, %37 : vector<8x32xf32>
    %c1_i32 = arith.constant 1 : i32
    %c8_i32_17 = arith.constant 8 : i32
    %39 = arith.muli %c1_i32, %c8_i32_17 : i32
    %40 = tpu.assume_multiple %39, 8 : i32
    %41 = arith.index_cast %40 : i32 to index
    %c0_18 = arith.constant 0 : index
    %42 = vector.load %arg7[%41, %c0_18] : memref<64x128xf32, #tpu.memory_space<vmem>>, vector<8x128xf32>
    %cst_19 = arith.constant dense<0.000000e+00> : vector<8x128xf32>
    %43 = tpu.matmul %38, %7, %cst_19 {dimension_numbers = #tpu.dot_dimension_numbers<[1], [0], [0], [1], [0, 0, 1, 1], [], []>} : vector<8x32xf32>, vector<32x128xf32>, vector<8x128xf32> -> vector<8x128xf32>
    %44 = arith.addf %42, %43 : vector<8x128xf32>
    %45 = math.tanh %44 : vector<8x128xf32>
    %46 = vector.broadcast %13 : vector<1x128xf32> to vector<8x128xf32>
    %47 = arith.mulf %45, %46 : vector<8x128xf32>
    %48 = vector.broadcast %16 : vector<1x128xf32> to vector<8x128xf32>
    %49 = arith.addf %47, %48 : vector<8x128xf32>
    %50 = vector.extract_strided_slice %49 {offsets = [0, 0], sizes = [8, 32], strides = [1, 1]} : vector<8x128xf32> to vector<8x32xf32>
    %51 = vector.extract_strided_slice %49 {offsets = [0, 32], sizes = [8, 32], strides = [1, 1]} : vector<8x128xf32> to vector<8x32xf32>
    %52 = vector.extract_strided_slice %49 {offsets = [0, 64], sizes = [8, 32], strides = [1, 1]} : vector<8x128xf32> to vector<8x32xf32>
    %53 = vector.extract_strided_slice %49 {offsets = [0, 96], sizes = [8, 32], strides = [1, 1]} : vector<8x128xf32> to vector<8x32xf32>
    %54 = arith.mulf %51, %36 : vector<8x32xf32>
    %55 = arith.mulf %50, %53 : vector<8x32xf32>
    %56 = arith.addf %54, %55 : vector<8x32xf32>
    %57 = math.tanh %56 : vector<8x32xf32>
    %58 = arith.mulf %52, %57 : vector<8x32xf32>
    %c2_i32 = arith.constant 2 : i32
    %c8_i32_20 = arith.constant 8 : i32
    %59 = arith.muli %c2_i32, %c8_i32_20 : i32
    %60 = tpu.assume_multiple %59, 8 : i32
    %61 = arith.index_cast %60 : i32 to index
    %c0_21 = arith.constant 0 : index
    %62 = vector.load %arg7[%61, %c0_21] : memref<64x128xf32, #tpu.memory_space<vmem>>, vector<8x128xf32>
    %cst_22 = arith.constant dense<0.000000e+00> : vector<8x128xf32>
    %63 = tpu.matmul %58, %7, %cst_22 {dimension_numbers = #tpu.dot_dimension_numbers<[1], [0], [0], [1], [0, 0, 1, 1], [], []>} : vector<8x32xf32>, vector<32x128xf32>, vector<8x128xf32> -> vector<8x128xf32>
    %64 = arith.addf %62, %63 : vector<8x128xf32>
    %65 = math.tanh %64 : vector<8x128xf32>
    %66 = vector.broadcast %13 : vector<1x128xf32> to vector<8x128xf32>
    %67 = arith.mulf %65, %66 : vector<8x128xf32>
    %68 = vector.broadcast %16 : vector<1x128xf32> to vector<8x128xf32>
    %69 = arith.addf %67, %68 : vector<8x128xf32>
    %70 = vector.extract_strided_slice %69 {offsets = [0, 0], sizes = [8, 32], strides = [1, 1]} : vector<8x128xf32> to vector<8x32xf32>
    %71 = vector.extract_strided_slice %69 {offsets = [0, 32], sizes = [8, 32], strides = [1, 1]} : vector<8x128xf32> to vector<8x32xf32>
    %72 = vector.extract_strided_slice %69 {offsets = [0, 64], sizes = [8, 32], strides = [1, 1]} : vector<8x128xf32> to vector<8x32xf32>
    %73 = vector.extract_strided_slice %69 {offsets = [0, 96], sizes = [8, 32], strides = [1, 1]} : vector<8x128xf32> to vector<8x32xf32>
    %74 = arith.mulf %71, %56 : vector<8x32xf32>
    %75 = arith.mulf %70, %73 : vector<8x32xf32>
    %76 = arith.addf %74, %75 : vector<8x32xf32>
    %77 = math.tanh %76 : vector<8x32xf32>
    %78 = arith.mulf %72, %77 : vector<8x32xf32>
    %c3_i32 = arith.constant 3 : i32
    %c8_i32_23 = arith.constant 8 : i32
    %79 = arith.muli %c3_i32, %c8_i32_23 : i32
    %80 = tpu.assume_multiple %79, 8 : i32
    %81 = arith.index_cast %80 : i32 to index
    %c0_24 = arith.constant 0 : index
    %82 = vector.load %arg7[%81, %c0_24] : memref<64x128xf32, #tpu.memory_space<vmem>>, vector<8x128xf32>
    %cst_25 = arith.constant dense<0.000000e+00> : vector<8x128xf32>
    %83 = tpu.matmul %78, %7, %cst_25 {dimension_numbers = #tpu.dot_dimension_numbers<[1], [0], [0], [1], [0, 0, 1, 1], [], []>} : vector<8x32xf32>, vector<32x128xf32>, vector<8x128xf32> -> vector<8x128xf32>
    %84 = arith.addf %82, %83 : vector<8x128xf32>
    %85 = math.tanh %84 : vector<8x128xf32>
    %86 = vector.broadcast %13 : vector<1x128xf32> to vector<8x128xf32>
    %87 = arith.mulf %85, %86 : vector<8x128xf32>
    %88 = vector.broadcast %16 : vector<1x128xf32> to vector<8x128xf32>
    %89 = arith.addf %87, %88 : vector<8x128xf32>
    %90 = vector.extract_strided_slice %89 {offsets = [0, 0], sizes = [8, 32], strides = [1, 1]} : vector<8x128xf32> to vector<8x32xf32>
    %91 = vector.extract_strided_slice %89 {offsets = [0, 32], sizes = [8, 32], strides = [1, 1]} : vector<8x128xf32> to vector<8x32xf32>
    %92 = vector.extract_strided_slice %89 {offsets = [0, 64], sizes = [8, 32], strides = [1, 1]} : vector<8x128xf32> to vector<8x32xf32>
    %93 = vector.extract_strided_slice %89 {offsets = [0, 96], sizes = [8, 32], strides = [1, 1]} : vector<8x128xf32> to vector<8x32xf32>
    %94 = arith.mulf %91, %76 : vector<8x32xf32>
    %95 = arith.mulf %90, %93 : vector<8x32xf32>
    %96 = arith.addf %94, %95 : vector<8x32xf32>
    %97 = math.tanh %96 : vector<8x32xf32>
    %98 = arith.mulf %92, %97 : vector<8x32xf32>
    %c4_i32 = arith.constant 4 : i32
    %c8_i32_26 = arith.constant 8 : i32
    %99 = arith.muli %c4_i32, %c8_i32_26 : i32
    %100 = tpu.assume_multiple %99, 8 : i32
    %101 = arith.index_cast %100 : i32 to index
    %c0_27 = arith.constant 0 : index
    %102 = vector.load %arg7[%101, %c0_27] : memref<64x128xf32, #tpu.memory_space<vmem>>, vector<8x128xf32>
    %cst_28 = arith.constant dense<0.000000e+00> : vector<8x128xf32>
    %103 = tpu.matmul %98, %7, %cst_28 {dimension_numbers = #tpu.dot_dimension_numbers<[1], [0], [0], [1], [0, 0, 1, 1], [], []>} : vector<8x32xf32>, vector<32x128xf32>, vector<8x128xf32> -> vector<8x128xf32>
    %104 = arith.addf %102, %103 : vector<8x128xf32>
    %105 = math.tanh %104 : vector<8x128xf32>
    %106 = vector.broadcast %13 : vector<1x128xf32> to vector<8x128xf32>
    %107 = arith.mulf %105, %106 : vector<8x128xf32>
    %108 = vector.broadcast %16 : vector<1x128xf32> to vector<8x128xf32>
    %109 = arith.addf %107, %108 : vector<8x128xf32>
    %110 = vector.extract_strided_slice %109 {offsets = [0, 0], sizes = [8, 32], strides = [1, 1]} : vector<8x128xf32> to vector<8x32xf32>
    %111 = vector.extract_strided_slice %109 {offsets = [0, 32], sizes = [8, 32], strides = [1, 1]} : vector<8x128xf32> to vector<8x32xf32>
    %112 = vector.extract_strided_slice %109 {offsets = [0, 64], sizes = [8, 32], strides = [1, 1]} : vector<8x128xf32> to vector<8x32xf32>
    %113 = vector.extract_strided_slice %109 {offsets = [0, 96], sizes = [8, 32], strides = [1, 1]} : vector<8x128xf32> to vector<8x32xf32>
    %114 = arith.mulf %111, %96 : vector<8x32xf32>
    %115 = arith.mulf %110, %113 : vector<8x32xf32>
    %116 = arith.addf %114, %115 : vector<8x32xf32>
    %117 = math.tanh %116 : vector<8x32xf32>
    %118 = arith.mulf %112, %117 : vector<8x32xf32>
    %c5_i32 = arith.constant 5 : i32
    %c8_i32_29 = arith.constant 8 : i32
    %119 = arith.muli %c5_i32, %c8_i32_29 : i32
    %120 = tpu.assume_multiple %119, 8 : i32
    %121 = arith.index_cast %120 : i32 to index
    %c0_30 = arith.constant 0 : index
    %122 = vector.load %arg7[%121, %c0_30] : memref<64x128xf32, #tpu.memory_space<vmem>>, vector<8x128xf32>
    %cst_31 = arith.constant dense<0.000000e+00> : vector<8x128xf32>
    %123 = tpu.matmul %118, %7, %cst_31 {dimension_numbers = #tpu.dot_dimension_numbers<[1], [0], [0], [1], [0, 0, 1, 1], [], []>} : vector<8x32xf32>, vector<32x128xf32>, vector<8x128xf32> -> vector<8x128xf32>
    %124 = arith.addf %122, %123 : vector<8x128xf32>
    %125 = math.tanh %124 : vector<8x128xf32>
    %126 = vector.broadcast %13 : vector<1x128xf32> to vector<8x128xf32>
    %127 = arith.mulf %125, %126 : vector<8x128xf32>
    %128 = vector.broadcast %16 : vector<1x128xf32> to vector<8x128xf32>
    %129 = arith.addf %127, %128 : vector<8x128xf32>
    %130 = vector.extract_strided_slice %129 {offsets = [0, 0], sizes = [8, 32], strides = [1, 1]} : vector<8x128xf32> to vector<8x32xf32>
    %131 = vector.extract_strided_slice %129 {offsets = [0, 32], sizes = [8, 32], strides = [1, 1]} : vector<8x128xf32> to vector<8x32xf32>
    %132 = vector.extract_strided_slice %129 {offsets = [0, 64], sizes = [8, 32], strides = [1, 1]} : vector<8x128xf32> to vector<8x32xf32>
    %133 = vector.extract_strided_slice %129 {offsets = [0, 96], sizes = [8, 32], strides = [1, 1]} : vector<8x128xf32> to vector<8x32xf32>
    %134 = arith.mulf %131, %116 : vector<8x32xf32>
    %135 = arith.mulf %130, %133 : vector<8x32xf32>
    %136 = arith.addf %134, %135 : vector<8x32xf32>
    %137 = math.tanh %136 : vector<8x32xf32>
    %138 = arith.mulf %132, %137 : vector<8x32xf32>
    %c6_i32 = arith.constant 6 : i32
    %c8_i32_32 = arith.constant 8 : i32
    %139 = arith.muli %c6_i32, %c8_i32_32 : i32
    %140 = tpu.assume_multiple %139, 8 : i32
    %141 = arith.index_cast %140 : i32 to index
    %c0_33 = arith.constant 0 : index
    %142 = vector.load %arg7[%141, %c0_33] : memref<64x128xf32, #tpu.memory_space<vmem>>, vector<8x128xf32>
    %cst_34 = arith.constant dense<0.000000e+00> : vector<8x128xf32>
    %143 = tpu.matmul %138, %7, %cst_34 {dimension_numbers = #tpu.dot_dimension_numbers<[1], [0], [0], [1], [0, 0, 1, 1], [], []>} : vector<8x32xf32>, vector<32x128xf32>, vector<8x128xf32> -> vector<8x128xf32>
    %144 = arith.addf %142, %143 : vector<8x128xf32>
    %145 = math.tanh %144 : vector<8x128xf32>
    %146 = vector.broadcast %13 : vector<1x128xf32> to vector<8x128xf32>
    %147 = arith.mulf %145, %146 : vector<8x128xf32>
    %148 = vector.broadcast %16 : vector<1x128xf32> to vector<8x128xf32>
    %149 = arith.addf %147, %148 : vector<8x128xf32>
    %150 = vector.extract_strided_slice %149 {offsets = [0, 0], sizes = [8, 32], strides = [1, 1]} : vector<8x128xf32> to vector<8x32xf32>
    %151 = vector.extract_strided_slice %149 {offsets = [0, 32], sizes = [8, 32], strides = [1, 1]} : vector<8x128xf32> to vector<8x32xf32>
    %152 = vector.extract_strided_slice %149 {offsets = [0, 64], sizes = [8, 32], strides = [1, 1]} : vector<8x128xf32> to vector<8x32xf32>
    %153 = vector.extract_strided_slice %149 {offsets = [0, 96], sizes = [8, 32], strides = [1, 1]} : vector<8x128xf32> to vector<8x32xf32>
    %154 = arith.mulf %151, %136 : vector<8x32xf32>
    %155 = arith.mulf %150, %153 : vector<8x32xf32>
    %156 = arith.addf %154, %155 : vector<8x32xf32>
    %157 = math.tanh %156 : vector<8x32xf32>
    %158 = arith.mulf %152, %157 : vector<8x32xf32>
    %c7_i32 = arith.constant 7 : i32
    %c8_i32_35 = arith.constant 8 : i32
    %159 = arith.muli %c7_i32, %c8_i32_35 : i32
    %160 = tpu.assume_multiple %159, 8 : i32
    %161 = arith.index_cast %160 : i32 to index
    %c0_36 = arith.constant 0 : index
    %162 = vector.load %arg7[%161, %c0_36] : memref<64x128xf32, #tpu.memory_space<vmem>>, vector<8x128xf32>
    %cst_37 = arith.constant dense<0.000000e+00> : vector<8x128xf32>
    %163 = tpu.matmul %158, %7, %cst_37 {dimension_numbers = #tpu.dot_dimension_numbers<[1], [0], [0], [1], [0, 0, 1, 1], [], []>} : vector<8x32xf32>, vector<32x128xf32>, vector<8x128xf32> -> vector<8x128xf32>
    %164 = arith.addf %162, %163 : vector<8x128xf32>
    %165 = math.tanh %164 : vector<8x128xf32>
    %166 = vector.broadcast %13 : vector<1x128xf32> to vector<8x128xf32>
    %167 = arith.mulf %165, %166 : vector<8x128xf32>
    %168 = vector.broadcast %16 : vector<1x128xf32> to vector<8x128xf32>
    %169 = arith.addf %167, %168 : vector<8x128xf32>
    %170 = vector.extract_strided_slice %169 {offsets = [0, 0], sizes = [8, 32], strides = [1, 1]} : vector<8x128xf32> to vector<8x32xf32>
    %171 = vector.extract_strided_slice %169 {offsets = [0, 32], sizes = [8, 32], strides = [1, 1]} : vector<8x128xf32> to vector<8x32xf32>
    %172 = vector.extract_strided_slice %169 {offsets = [0, 64], sizes = [8, 32], strides = [1, 1]} : vector<8x128xf32> to vector<8x32xf32>
    %173 = vector.extract_strided_slice %169 {offsets = [0, 96], sizes = [8, 32], strides = [1, 1]} : vector<8x128xf32> to vector<8x32xf32>
    %174 = arith.mulf %171, %156 : vector<8x32xf32>
    %175 = arith.mulf %170, %173 : vector<8x32xf32>
    %176 = arith.addf %174, %175 : vector<8x32xf32>
    %177 = math.tanh %176 : vector<8x32xf32>
    %178 = arith.mulf %172, %177 : vector<8x32xf32>
    %c8_i32_38 = arith.constant 8 : i32
    %c0_39 = arith.constant 0 : index
    %c0_40 = arith.constant 0 : index
    %179 = vector.load %arg4[%c0_39, %c0_40] : memref<1x32xf32, #tpu.memory_space<vmem>>, vector<1x32xf32>
    %cst_41 = arith.constant dense<0.000000e+00> : vector<1x8xf32>
    %180 = tpu.matmul %179, %178, %cst_41 {dimension_numbers = #tpu.dot_dimension_numbers<[1], [1], [0], [0], [0, 0, 1, 0], [], []>} : vector<1x32xf32>, vector<8x32xf32>, vector<1x8xf32> -> vector<1x8xf32>
    %c0_42 = arith.constant 0 : index
    %181 = memref.load %arg5[%c0_42] : memref<1xf32, #tpu.memory_space<smem>>
    %182 = vector.broadcast %181 : f32 to vector<1x8xf32>
    %183 = arith.addf %180, %182 : vector<1x8xf32>
    %c0_43 = arith.constant 0 : index
    %c0_44 = arith.constant 0 : index
    %184 = vector.load %arg6[%c0_43, %c0_44] : memref<1x8xf32, #tpu.memory_space<vmem>>, vector<1x8xf32>
    tpu.vector_store %arg6[%c0_43, %c0_44], %183 {strides = array<i32>} : memref<1x8xf32, #tpu.memory_space<vmem>>, vector<1x8xf32>,
    return
  }
}

</mosaic_0001>

<llo_original>
// kernel: lstm_model_forward.1
$region0: #{lstm_model_forward.1}
  #allocation0 [shape = 'u32[]', space=smem, size = 0x4, offset = 0x4, fixed_abs, tag = 'smem constant byte address 0x4 - core index']
  #allocation1 [shape = 'u32[144,128]{1,0:T(1,128)}', space=vmem, size = 0x12000, scoped, tag = 'internal scratch']
  #allocation2 [shape = 'f32[64,128]{1,0:T(8,128)}', space=vmem, size = 0x8000, scoped, tag = 'scratch operand']
  #allocation3 [shape = 'f32[1]{0:T(128)S(6)}', space=smem, size = 0x200, scoped, tag = 'scoped memory for lstm_model_forward.1']
  %s0 = inlined_call_operand.vmem [shape: f32[64,4], index: 0, kind: input, shape index: {}]
  %s1 = inlined_call_operand.vmem [shape: f32[4,128], index: 1, kind: input, shape index: {}]
  %s2 = inlined_call_operand.vmem [shape: f32[32,128], index: 2, kind: input, shape index: {}]
  %s3 = inlined_call_operand.vmem [shape: f32[1,128], index: 3, kind: input, shape index: {}]
  %s4 = inlined_call_operand.vmem [shape: f32[1,32], index: 4, kind: input, shape index: {}]
  %s5 = inlined_call_operand.<no memory space> [shape: f32[1], index: 5, kind: input, shape index: {}]
  %s6 = inlined_call_operand.vmem [shape: f32[1,8], index: 6, kind: output, shape index: {}]
  %s7 = sld [smem:[#allocation0]]
  $region34: #{lstm_model_forward.1} parent=0
    _
  %s9 = ssub.s32 1, %s7
  %s10 = scalar_select 0, %s9, %s7
  %11 = sst [smem:[#allocation3]] %s5
  // Predicated region
  $region2: #{lstm_model_forward.1} parent=0 // pred_check
    _
  $region3: #{lstm_model_forward.1} parent=0 // pred_check_branch
    %13 = sbr.rel (0) target = $region5
  $region4: #{lstm_model_forward.1} parent=0 // pred_region
    _
  $region5: #{lstm_model_forward.1} parent=0 // pred_fallthru
    _
  // Predicated region
  $region6: #{lstm_model_forward.1} parent=0 // pred_check
    _
  $region7: #{lstm_model_forward.1} parent=0 // pred_check_branch
    %15 = sbr.rel (0) target = $region9
  $region8: #{lstm_model_forward.1} parent=0 // pred_region
    _
  $region9: #{lstm_model_forward.1} parent=0 // pred_fallthru
    _
  // Predicated region
  $region10: #{lstm_model_forward.1} parent=0 // pred_check
    _
  $region11: #{lstm_model_forward.1} parent=0 // pred_check_branch
    %17 = sbr.rel (0) target = $region13
  $region12: #{lstm_model_forward.1} parent=0 // pred_region
    _
  $region13: #{lstm_model_forward.1} parent=0 // pred_fallthru
    _
  // Predicated region
  $region14: #{lstm_model_forward.1} parent=0 // pred_check
    _
  $region15: #{lstm_model_forward.1} parent=0 // pred_check_branch
    %19 = sbr.rel (0) target = $region17
  $region16: #{lstm_model_forward.1} parent=0 // pred_region
    _
  $region17: #{lstm_model_forward.1} parent=0 // pred_fallthru
    _
  // Predicated region
  $region18: #{lstm_model_forward.1} parent=0 // pred_check
    _
  $region19: #{lstm_model_forward.1} parent=0 // pred_check_branch
    %21 = sbr.rel (0) target = $region21
  $region20: #{lstm_model_forward.1} parent=0 // pred_region
    _
  $region21: #{lstm_model_forward.1} parent=0 // pred_fallthru
    _
  // Predicated region
  $region22: #{lstm_model_forward.1} parent=0 // pred_check
    _
  $region23: #{lstm_model_forward.1} parent=0 // pred_check_branch
    %23 = sbr.rel (0) target = $region25
  $region24: #{lstm_model_forward.1} parent=0 // pred_region
    _
  $region25: #{lstm_model_forward.1} parent=0 // pred_fallthru
    _
  %v24 = vld [vmem:[%s0] sm:$0xff]
  %v25 = vld [vmem:[%s0 + $0x8] sm:$0xff]
  %v26 = vld [vmem:[%s0 + $0x10] sm:$0xff]
  %v27 = vld [vmem:[%s0 + $0x18] sm:$0xff]
  %v28 = vld [vmem:[%s0 + $0x20] sm:$0xff]
  %v29 = vld [vmem:[%s0 + $0x28] sm:$0xff]
  %v30 = vld [vmem:[%s0 + $0x30] sm:$0xff]
  %v31 = vld [vmem:[%s0 + $0x38] sm:$0xff]
  %v32 = vld [vmem:[%s1] sm:$0xf]
  %v33 = vld [vmem:[%s3] sm:$0x1]
  %v35 = vlaneseq
  %v36 = vshrl.u32 %v35, 7
  %v37 = vsub.s32 0, %v36
  %v38 = vrot.slane %v33, %v37
  %vm40 = vcmask 31744
  %v42 = vsel %vm40, %v24, 0
  %v45 = vsel %vm40, %v25, 0
  %v48 = vsel %vm40, %v26, 0
  %v51 = vsel %vm40, %v27, 0
  %v54 = vsel %vm40, %v28, 0
  %v57 = vsel %vm40, %v29, 0
  %v60 = vsel %vm40, %v30, 0
  %v63 = vsel %vm40, %v31, 0
  %vm65 = vcmask 1043456
  %v67 = vsel %vm65, %v32, 0
  %69 = vmatprep.subr.mxu0 0.0
  %70 = vmatpush1.msra.mxu0 %v67
  %71 = vmatprep.subr.mxu0 0.0
  %72 = vmatpush1.msra.mxu0 0.0
  %73 = vmatprep.subr.mxu0 0.0
  %74 = vmatpush1.msra.mxu0 0.0
  %75 = vmatprep.subr.mxu0 0.0
  %76 = vmatpush1.msra.mxu0 0.0
  %77 = vmatprep.subr.mxu0 0.0
  %78 = vmatpush1.msra.mxu0 0.0
  %79 = vmatprep.subr.mxu0 0.0
  %80 = vmatpush1.msra.mxu0 0.0
  %81 = vmatprep.subr.mxu0 0.0
  %82 = vmatpush1.msra.mxu0 0.0
  %83 = vmatprep.subr.mxu0 0.0
  %84 = vmatpush1.msra.mxu0 0.0
  %85 = vmatprep.subr.mxu0 0.0
  %86 = vmatpush1.msra.mxu0 0.0
  %87 = vmatprep.subr.mxu0 0.0
  %88 = vmatpush1.msra.mxu0 0.0
  %89 = vmatprep.subr.mxu0 0.0
  %90 = vmatpush1.msra.mxu0 0.0
  %91 = vmatprep.subr.mxu0 0.0
  %92 = vmatpush1.msra.mxu0 0.0
  %93 = vmatprep.subr.mxu0 0.0
  %94 = vmatpush1.msra.mxu0 0.0
  %95 = vmatprep.subr.mxu0 0.0
  %96 = vmatpush1.msra.mxu0 0.0
  %97 = vmatprep.subr.mxu0 0.0
  %98 = vmatpush1.msra.mxu0 0.0
  %99 = vmatprep.subr.mxu0 0.0
  %100 = vmatpush1.msra.mxu0 0.0
  %101 = vmatprep.subr.mxu0 0.0
  %102 = vmatpush1.msra.mxu0 0.0
  %103 = vmatprep.subr.mxu0 0.0
  %104 = vmatpush1.msra.mxu0 0.0
  %105 = vmatprep.subr.mxu0 0.0
  %106 = vmatpush1.msra.mxu0 0.0
  %107 = vmatprep.subr.mxu0 0.0
  %108 = vmatpush1.msra.mxu0 0.0
  %109 = vmatprep.subr.mxu0 0.0
  %110 = vmatpush1.msra.mxu0 0.0
  %111 = vmatprep.subr.mxu0 0.0
  %112 = vmatpush1.msra.mxu0 0.0
  %113 = vmatprep.subr.mxu0 0.0
  %114 = vmatpush1.msra.mxu0 0.0
  %115 = vmatprep.subr.mxu0 0.0
  %116 = vmatpush1.msra.mxu0 0.0
  %117 = vmatprep.subr.mxu0 0.0
  %118 = vmatpush1.msra.mxu0 0.0
  %119 = vmatprep.subr.mxu0 0.0
  %120 = vmatpush1.msra.mxu0 0.0
  %121 = vmatprep.subr.mxu0 0.0
  %122 = vmatpush1.msra.mxu0 0.0
  %123 = vmatprep.subr.mxu0 0.0
  %124 = vmatpush1.msra.mxu0 0.0
  %125 = vmatprep.subr.mxu0 0.0
  %126 = vmatpush1.msra.mxu0 0.0
  %127 = vmatprep.subr.mxu0 0.0
  %128 = vmatpush1.msra.mxu0 0.0
  %129 = vmatprep.subr.mxu0 0.0
  %130 = vmatpush1.msra.mxu0 0.0
  %131 = vmatprep.subr.mxu0 0.0
  %132 = vmatpush1.msra.mxu0 0.0
  %133 = vmatprep.mubr.f32.mxu0 0.0
  %134 = vmatmul.mubr.f32.gmra.mrb[0].mxu0 %v42
  %v135 = vpop.f32.mrb[0].mxu0
  %v136 = vadd.f32 %v38, %v135
  %v137 = vpop.f32.mrb[0].mxu0
  %138 = vmatprep.mubr.f32.mxu0 0.0
  %139 = vmatmul.mubr.f32.gmra.mrb[0].mxu0 %v45
  %v140 = vpop.f32.mrb[0].mxu0
  %v141 = vadd.f32 %v38, %v140
  %v142 = vpop.f32.mrb[0].mxu0
  %143 = vmatprep.mubr.f32.mxu0 0.0
  %144 = vmatmul.mubr.f32.gmra.mrb[0].mxu0 %v48
  %v145 = vpop.f32.mrb[0].mxu0
  %v146 = vadd.f32 %v38, %v145
  %v147 = vpop.f32.mrb[0].mxu0
  %148 = vmatprep.mubr.f32.mxu0 0.0
  %149 = vmatmul.mubr.f32.gmra.mrb[0].mxu0 %v51
  %v150 = vpop.f32.mrb[0].mxu0
  %v151 = vadd.f32 %v38, %v150
  %v152 = vpop.f32.mrb[0].mxu0
  %153 = vmatprep.mubr.f32.mxu0 0.0
  %154 = vmatmul.mubr.f32.gmra.mrb[0].mxu0 %v54
  %v155 = vpop.f32.mrb[0].mxu0
  %v156 = vadd.f32 %v38, %v155
  %v157 = vpop.f32.mrb[0].mxu0
  %158 = vmatprep.mubr.f32.mxu0 0.0
  %159 = vmatmul.mubr.f32.gmra.mrb[0].mxu0 %v57
  %v160 = vpop.f32.mrb[0].mxu0
  %v161 = vadd.f32 %v38, %v160
  %v162 = vpop.f32.mrb[0].mxu0
  %163 = vmatprep.mubr.f32.mxu0 0.0
  %164 = vmatmul.mubr.f32.gmra.mrb[0].mxu0 %v60
  %v165 = vpop.f32.mrb[0].mxu0
  %v166 = vadd.f32 %v38, %v165
  %v167 = vpop.f32.mrb[0].mxu0
  %168 = vmatprep.mubr.f32.mxu0 0.0
  %169 = vmatmul.mubr.f32.gmra.mrb[0].mxu0 %v63
  %v170 = vpop.f32.mrb[0].mxu0
  %v171 = vadd.f32 %v38, %v170
  %v172 = vpop.f32.mrb[0].mxu0
  %173 = vdwg.mxu0
  %174 = vst [vmem:[#allocation2] sm:$0xff] %v136
  %175 = vst [vmem:[#allocation2 + $0x8] sm:$0xff] %v141
  %176 = vst [vmem:[#allocation2 + $0x10] sm:$0xff] %v146
  %177 = vst [vmem:[#allocation2 + $0x18] sm:$0xff] %v151
  %178 = vst [vmem:[#allocation2 + $0x20] sm:$0xff] %v156
  %179 = vst [vmem:[#allocation2 + $0x28] sm:$0xff] %v161
  %180 = vst [vmem:[#allocation2 + $0x30] sm:$0xff] %v166
  %181 = vst [vmem:[#allocation2 + $0x38] sm:$0xff] %v171
  %v182 = vld [vmem:[%s2] sm:$0xff]
  %v183 = vld [vmem:[%s2 + $0x8] sm:$0xff]
  %v184 = vld [vmem:[%s2 + $0x10] sm:$0xff]
  %v185 = vld [vmem:[%s2 + $0x18] sm:$0xff]
  %v186 = vlaneseq
  %v187 = vand.u32 %v186, 127
  %vm188 = vcmp.lt.s32.totalorder %v187, 96
  %v189 = vsel %vm188, 0.5, 1.0
  %v190 = vsel %vm188, 0.5, 0.0
  %v191 = vld [vmem:[#allocation2] sm:$0xff]
  %vm192 = vcmask 261120
  %v194 = vsel %vm192, 0.0, 0
  %196 = vmatprep.subr.mxu0 0.0
  %197 = vmatpush1.msra.mxu0 %v182
  %198 = vmatprep.subr.mxu0 0.0
  %199 = vmatpush1.msra.mxu0 %v183
  %200 = vmatprep.subr.mxu0 0.0
  %201 = vmatpush1.msra.mxu0 %v184
  %202 = vmatprep.subr.mxu0 0.0
  %203 = vmatpush1.msra.mxu0 %v185
  %204 = vmatprep.subr.mxu0 0.0
  %205 = vmatpush1.msra.mxu0 0.0
  %206 = vmatprep.subr.mxu0 0.0
  %207 = vmatpush1.msra.mxu0 0.0
  %208 = vmatprep.subr.mxu0 0.0
  %209 = vmatpush1.msra.mxu0 0.0
  %210 = vmatprep.subr.mxu0 0.0
  %211 = vmatpush1.msra.mxu0 0.0
  %212 = vmatprep.subr.mxu0 0.0
  %213 = vmatpush1.msra.mxu0 0.0
  %214 = vmatprep.subr.mxu0 0.0
  %215 = vmatpush1.msra.mxu0 0.0
  %216 = vmatprep.subr.mxu0 0.0
  %217 = vmatpush1.msra.mxu0 0.0
  %218 = vmatprep.subr.mxu0 0.0
  %219 = vmatpush1.msra.mxu0 0.0
  %220 = vmatprep.subr.mxu0 0.0
  %221 = vmatpush1.msra.mxu0 0.0
  %222 = vmatprep.subr.mxu0 0.0
  %223 = vmatpush1.msra.mxu0 0.0
  %224 = vmatprep.subr.mxu0 0.0
  %225 = vmatpush1.msra.mxu0 0.0
  %226 = vmatprep.subr.mxu0 0.0
  %227 = vmatpush1.msra.mxu0 0.0
  %228 = vmatprep.subr.mxu0 0.0
  %229 = vmatpush1.msra.mxu0 0.0
  %230 = vmatprep.subr.mxu0 0.0
  %231 = vmatpush1.msra.mxu0 0.0
  %232 = vmatprep.subr.mxu0 0.0
  %233 = vmatpush1.msra.mxu0 0.0
  %234 = vmatprep.subr.mxu0 0.0
  %235 = vmatpush1.msra.mxu0 0.0
  %236 = vmatprep.subr.mxu0 0.0
  %237 = vmatpush1.msra.mxu0 0.0
  %238 = vmatprep.subr.mxu0 0.0
  %239 = vmatpush1.msra.mxu0 0.0
  %240 = vmatprep.subr.mxu0 0.0
  %241 = vmatpush1.msra.mxu0 0.0
  %242 = vmatprep.subr.mxu0 0.0
  %243 = vmatpush1.msra.mxu0 0.0
  %244 = vmatprep.subr.mxu0 0.0
  %245 = vmatpush1.msra.mxu0 0.0
  %246 = vmatprep.subr.mxu0 0.0
  %247 = vmatpush1.msra.mxu0 0.0
  %248 = vmatprep.subr.mxu0 0.0
  %249 = vmatpush1.msra.mxu0 0.0
  %250 = vmatprep.subr.mxu0 0.0
  %251 = vmatpush1.msra.mxu0 0.0
  %252 = vmatprep.subr.mxu0 0.0
  %253 = vmatpush1.msra.mxu0 0.0
  %254 = vmatprep.subr.mxu0 0.0
  %255 = vmatpush1.msra.mxu0 0.0
  %256 = vmatprep.subr.mxu0 0.0
  %257 = vmatpush1.msra.mxu0 0.0
  %258 = vmatprep.subr.mxu0 0.0
  %259 = vmatpush1.msra.mxu0 0.0
  %260 = vmatprep.mubr.f32.mxu0 0.0
  %261 = vmatmul.mubr.f32.gmra.mrb[0].mxu0 %v194
  %v262 = vpop.f32.mrb[0].mxu0
  %v263 = vadd.f32 0.0, %v262
  %v264 = vpop.f32.mrb[0].mxu0
  %265 = vdwg.mxu0
  %v266 = vadd.f32 %v191, %v263
  %v267 = vtanh.pop %v266
  %v268 = vmul.f32 %v267, %v189
  %v269 = vadd.f32 %v268, %v190
  %v270 = vmul.f32 %v269, 0.0
  %272 = vrot.lane.b32.xlu0 %v269, 32
  %v273 = vpop.permute.xlu0 %272
  %v275 = vmul.f32 %v269, %v273
  %277 = vrot.lane.b32.xlu0 %v275, 32
  %v278 = vpop.permute.xlu0 %277
  %v280 = vadd.f32 %v270, %v278
  %v281 = vtanh.pop %v280
  %283 = vrot.lane.b32.xlu0 %v281, 32
  %v284 = vpop.permute.xlu0 %283
  %v286 = vmul.f32 %v269, %v284
  %s287 = scalar_lea.vmem [#allocation2], 8
  %v288 = vld [vmem:[%s287] sm:$0xff]
  %290 = vrot.lane.b32.xlu0 %v286, 64
  %v291 = vpop.permute.xlu0 %290
  %v292 = vsel %vm192, %v291, 0
  %294 = vmatprep.subr.mxu0 0.0
  %295 = vmatpush1.msra.mxu0 %v182
  %296 = vmatprep.subr.mxu0 0.0
  %297 = vmatpush1.msra.mxu0 %v183
  %298 = vmatprep.subr.mxu0 0.0
  %299 = vmatpush1.msra.mxu0 %v184
  %300 = vmatprep.subr.mxu0 0.0
  %301 = vmatpush1.msra.mxu0 %v185
  %302 = vmatprep.subr.mxu0 0.0
  %303 = vmatpush1.msra.mxu0 0.0
  %304 = vmatprep.subr.mxu0 0.0
  %305 = vmatpush1.msra.mxu0 0.0
  %306 = vmatprep.subr.mxu0 0.0
  %307 = vmatpush1.msra.mxu0 0.0
  %308 = vmatprep.subr.mxu0 0.0
  %309 = vmatpush1.msra.mxu0 0.0
  %310 = vmatprep.subr.mxu0 0.0
  %311 = vmatpush1.msra.mxu0 0.0
  %312 = vmatprep.subr.mxu0 0.0
  %313 = vmatpush1.msra.mxu0 0.0
  %314 = vmatprep.subr.mxu0 0.0
  %315 = vmatpush1.msra.mxu0 0.0
  %316 = vmatprep.subr.mxu0 0.0
  %317 = vmatpush1.msra.mxu0 0.0
  %318 = vmatprep.subr.mxu0 0.0
  %319 = vmatpush1.msra.mxu0 0.0
  %320 = vmatprep.subr.mxu0 0.0
  %321 = vmatpush1.msra.mxu0 0.0
  %322 = vmatprep.subr.mxu0 0.0
  %323 = vmatpush1.msra.mxu0 0.0
  %324 = vmatprep.subr.mxu0 0.0
  %325 = vmatpush1.msra.mxu0 0.0
  %326 = vmatprep.subr.mxu0 0.0
  %327 = vmatpush1.msra.mxu0 0.0
  %328 = vmatprep.subr.mxu0 0.0
  %329 = vmatpush1.msra.mxu0 0.0
  %330 = vmatprep.subr.mxu0 0.0
  %331 = vmatpush1.msra.mxu0 0.0
  %332 = vmatprep.subr.mxu0 0.0
  %333 = vmatpush1.msra.mxu0 0.0
  %334 = vmatprep.subr.mxu0 0.0
  %335 = vmatpush1.msra.mxu0 0.0
  %336 = vmatprep.subr.mxu0 0.0
  %337 = vmatpush1.msra.mxu0 0.0
  %338 = vmatprep.subr.mxu0 0.0
  %339 = vmatpush1.msra.mxu0 0.0
  %340 = vmatprep.subr.mxu0 0.0
  %341 = vmatpush1.msra.mxu0 0.0
  %342 = vmatprep.subr.mxu0 0.0
  %343 = vmatpush1.msra.mxu0 0.0
  %344 = vmatprep.subr.mxu0 0.0
  %345 = vmatpush1.msra.mxu0 0.0
  %346 = vmatprep.subr.mxu0 0.0
  %347 = vmatpush1.msra.mxu0 0.0
  %348 = vmatprep.subr.mxu0 0.0
  %349 = vmatpush1.msra.mxu0 0.0
  %350 = vmatprep.subr.mxu0 0.0
  %351 = vmatpush1.msra.mxu0 0.0
  %352 = vmatprep.subr.mxu0 0.0
  %353 = vmatpush1.msra.mxu0 0.0
  %354 = vmatprep.subr.mxu0 0.0
  %355 = vmatpush1.msra.mxu0 0.0
  %356 = vmatprep.subr.mxu0 0.0
  %357 = vmatpush1.msra.mxu0 0.0
  %358 = vmatprep.mubr.f32.mxu0 0.0
  %359 = vmatmul.mubr.f32.gmra.mrb[0].mxu0 %v292
  %v360 = vpop.f32.mrb[0].mxu0
  %v361 = vadd.f32 0.0, %v360
  %v362 = vpop.f32.mrb[0].mxu0
  %363 = vdwg.mxu0
  %v364 = vadd.f32 %v288, %v361
  %v365 = vtanh.pop %v364
  %v366 = vmul.f32 %v365, %v189
  %v367 = vadd.f32 %v366, %v190
  %v368 = vmul.f32 %v367, %v280
  %370 = vrot.lane.b32.xlu0 %v367, 32
  %v371 = vpop.permute.xlu0 %370
  %v373 = vmul.f32 %v367, %v371
  %375 = vrot.lane.b32.xlu0 %v373, 32
  %v376 = vpop.permute.xlu0 %375
  %v378 = vadd.f32 %v368, %v376
  %v379 = vtanh.pop %v378
  %381 = vrot.lane.b32.xlu0 %v379, 32
  %v382 = vpop.permute.xlu0 %381
  %v384 = vmul.f32 %v367, %v382
  %s385 = scalar_lea.vmem [#allocation2], 16
  %v386 = vld [vmem:[%s385] sm:$0xff]
  %388 = vrot.lane.b32.xlu0 %v384, 64
  %v389 = vpop.permute.xlu0 %388
  %v390 = vsel %vm192, %v389, 0
  %392 = vmatprep.subr.mxu0 0.0
  %393 = vmatpush1.msra.mxu0 %v182
  %394 = vmatprep.subr.mxu0 0.0
  %395 = vmatpush1.msra.mxu0 %v183
  %396 = vmatprep.subr.mxu0 0.0
  %397 = vmatpush1.msra.mxu0 %v184
  %398 = vmatprep.subr.mxu0 0.0
  %399 = vmatpush1.msra.mxu0 %v185
  %400 = vmatprep.subr.mxu0 0.0
  %401 = vmatpush1.msra.mxu0 0.0
  %402 = vmatprep.subr.mxu0 0.0
  %403 = vmatpush1.msra.mxu0 0.0
  %404 = vmatprep.subr.mxu0 0.0
  %405 = vmatpush1.msra.mxu0 0.0
  %406 = vmatprep.subr.mxu0 0.0
  %407 = vmatpush1.msra.mxu0 0.0
  %408 = vmatprep.subr.mxu0 0.0
  %409 = vmatpush1.msra.mxu0 0.0
  %410 = vmatprep.subr.mxu0 0.0
  %411 = vmatpush1.msra.mxu0 0.0
  %412 = vmatprep.subr.mxu0 0.0
  %413 = vmatpush1.msra.mxu0 0.0
  %414 = vmatprep.subr.mxu0 0.0
  %415 = vmatpush1.msra.mxu0 0.0
  %416 = vmatprep.subr.mxu0 0.0
  %417 = vmatpush1.msra.mxu0 0.0
  %418 = vmatprep.subr.mxu0 0.0
  %419 = vmatpush1.msra.mxu0 0.0
  %420 = vmatprep.subr.mxu0 0.0
  %421 = vmatpush1.msra.mxu0 0.0
  %422 = vmatprep.subr.mxu0 0.0
  %423 = vmatpush1.msra.mxu0 0.0
  %424 = vmatprep.subr.mxu0 0.0
  %425 = vmatpush1.msra.mxu0 0.0
  %426 = vmatprep.subr.mxu0 0.0
  %427 = vmatpush1.msra.mxu0 0.0
  %428 = vmatprep.subr.mxu0 0.0
  %429 = vmatpush1.msra.mxu0 0.0
  %430 = vmatprep.subr.mxu0 0.0
  %431 = vmatpush1.msra.mxu0 0.0
  %432 = vmatprep.subr.mxu0 0.0
  %433 = vmatpush1.msra.mxu0 0.0
  %434 = vmatprep.subr.mxu0 0.0
  %435 = vmatpush1.msra.mxu0 0.0
  %436 = vmatprep.subr.mxu0 0.0
  %437 = vmatpush1.msra.mxu0 0.0
  %438 = vmatprep.subr.mxu0 0.0
  %439 = vmatpush1.msra.mxu0 0.0
  %440 = vmatprep.subr.mxu0 0.0
  %441 = vmatpush1.msra.mxu0 0.0
  %442 = vmatprep.subr.mxu0 0.0
  %443 = vmatpush1.msra.mxu0 0.0
  %444 = vmatprep.subr.mxu0 0.0
  %445 = vmatpush1.msra.mxu0 0.0
  %446 = vmatprep.subr.mxu0 0.0
  %447 = vmatpush1.msra.mxu0 0.0
  %448 = vmatprep.subr.mxu0 0.0
  %449 = vmatpush1.msra.mxu0 0.0
  %450 = vmatprep.subr.mxu0 0.0
  %451 = vmatpush1.msra.mxu0 0.0
  %452 = vmatprep.subr.mxu0 0.0
  %453 = vmatpush1.msra.mxu0 0.0
  %454 = vmatprep.subr.mxu0 0.0
  %455 = vmatpush1.msra.mxu0 0.0
  %456 = vmatprep.mubr.f32.mxu0 0.0
  %457 = vmatmul.mubr.f32.gmra.mrb[0].mxu0 %v390
  %v458 = vpop.f32.mrb[0].mxu0
  %v459 = vadd.f32 0.0, %v458
  %v460 = vpop.f32.mrb[0].mxu0
  %461 = vdwg.mxu0
  %v462 = vadd.f32 %v386, %v459
  %v463 = vtanh.pop %v462
  %v464 = vmul.f32 %v463, %v189
  %v465 = vadd.f32 %v464, %v190
  %v466 = vmul.f32 %v465, %v378
  %468 = vrot.lane.b32.xlu0 %v465, 32
  %v469 = vpop.permute.xlu0 %468
  %v471 = vmul.f32 %v465, %v469
  %473 = vrot.lane.b32.xlu0 %v471, 32
  %v474 = vpop.permute.xlu0 %473
  %v476 = vadd.f32 %v466, %v474
  %v477 = vtanh.pop %v476
  %479 = vrot.lane.b32.xlu0 %v477, 32
  %v480 = vpop.permute.xlu0 %479
  %v482 = vmul.f32 %v465, %v480
  %s483 = scalar_lea.vmem [#allocation2], 24
  %v484 = vld [vmem:[%s483] sm:$0xff]
  %486 = vrot.lane.b32.xlu0 %v482, 64
  %v487 = vpop.permute.xlu0 %486
  %v488 = vsel %vm192, %v487, 0
  %490 = vmatprep.subr.mxu0 0.0
  %491 = vmatpush1.msra.mxu0 %v182
  %492 = vmatprep.subr.mxu0 0.0
  %493 = vmatpush1.msra.mxu0 %v183
  %494 = vmatprep.subr.mxu0 0.0
  %495 = vmatpush1.msra.mxu0 %v184
  %496 = vmatprep.subr.mxu0 0.0
  %497 = vmatpush1.msra.mxu0 %v185
  %498 = vmatprep.subr.mxu0 0.0
  %499 = vmatpush1.msra.mxu0 0.0
  %500 = vmatprep.subr.mxu0 0.0
  %501 = vmatpush1.msra.mxu0 0.0
  %502 = vmatprep.subr.mxu0 0.0
  %503 = vmatpush1.msra.mxu0 0.0
  %504 = vmatprep.subr.mxu0 0.0
  %505 = vmatpush1.msra.mxu0 0.0
  %506 = vmatprep.subr.mxu0 0.0
  %507 = vmatpush1.msra.mxu0 0.0
  %508 = vmatprep.subr.mxu0 0.0
  %509 = vmatpush1.msra.mxu0 0.0
  %510 = vmatprep.subr.mxu0 0.0
  %511 = vmatpush1.msra.mxu0 0.0
  %512 = vmatprep.subr.mxu0 0.0
  %513 = vmatpush1.msra.mxu0 0.0
  %514 = vmatprep.subr.mxu0 0.0
  %515 = vmatpush1.msra.mxu0 0.0
  %516 = vmatprep.subr.mxu0 0.0
  %517 = vmatpush1.msra.mxu0 0.0
  %518 = vmatprep.subr.mxu0 0.0
  %519 = vmatpush1.msra.mxu0 0.0
  %520 = vmatprep.subr.mxu0 0.0
  %521 = vmatpush1.msra.mxu0 0.0
  %522 = vmatprep.subr.mxu0 0.0
  %523 = vmatpush1.msra.mxu0 0.0
  %524 = vmatprep.subr.mxu0 0.0
  %525 = vmatpush1.msra.mxu0 0.0
  %526 = vmatprep.subr.mxu0 0.0
  %527 = vmatpush1.msra.mxu0 0.0
  %528 = vmatprep.subr.mxu0 0.0
  %529 = vmatpush1.msra.mxu0 0.0
  %530 = vmatprep.subr.mxu0 0.0
  %531 = vmatpush1.msra.mxu0 0.0
  %532 = vmatprep.subr.mxu0 0.0
  %533 = vmatpush1.msra.mxu0 0.0
  %534 = vmatprep.subr.mxu0 0.0
  %535 = vmatpush1.msra.mxu0 0.0
  %536 = vmatprep.subr.mxu0 0.0
  %537 = vmatpush1.msra.mxu0 0.0
  %538 = vmatprep.subr.mxu0 0.0
  %539 = vmatpush1.msra.mxu0 0.0
  %540 = vmatprep.subr.mxu0 0.0
  %541 = vmatpush1.msra.mxu0 0.0
  %542 = vmatprep.subr.mxu0 0.0
  %543 = vmatpush1.msra.mxu0 0.0
  %544 = vmatprep.subr.mxu0 0.0
  %545 = vmatpush1.msra.mxu0 0.0
  %546 = vmatprep.subr.mxu0 0.0
  %547 = vmatpush1.msra.mxu0 0.0
  %548 = vmatprep.subr.mxu0 0.0
  %549 = vmatpush1.msra.mxu0 0.0
  %550 = vmatprep.subr.mxu0 0.0
  %551 = vmatpush1.msra.mxu0 0.0
  %552 = vmatprep.subr.mxu0 0.0
  %553 = vmatpush1.msra.mxu0 0.0
  %554 = vmatprep.mubr.f32.mxu0 0.0
  %555 = vmatmul.mubr.f32.gmra.mrb[0].mxu0 %v488
  %v556 = vpop.f32.mrb[0].mxu0
  %v557 = vadd.f32 0.0, %v556
  %v558 = vpop.f32.mrb[0].mxu0
  %559 = vdwg.mxu0
  %v560 = vadd.f32 %v484, %v557
  %v561 = vtanh.pop %v560
  %v562 = vmul.f32 %v561, %v189
  %v563 = vadd.f32 %v562, %v190
  %v564 = vmul.f32 %v563, %v476
  %566 = vrot.lane.b32.xlu0 %v563, 32
  %v567 = vpop.permute.xlu0 %566
  %v569 = vmul.f32 %v563, %v567
  %571 = vrot.lane.b32.xlu0 %v569, 32
  %v572 = vpop.permute.xlu0 %571
  %v574 = vadd.f32 %v564, %v572
  %v575 = vtanh.pop %v574
  %577 = vrot.lane.b32.xlu0 %v575, 32
  %v578 = vpop.permute.xlu0 %577
  %v580 = vmul.f32 %v563, %v578
  %s581 = scalar_lea.vmem [#allocation2], 32
  %v582 = vld [vmem:[%s581] sm:$0xff]
  %584 = vrot.lane.b32.xlu0 %v580, 64
  %v585 = vpop.permute.xlu0 %584
  %v586 = vsel %vm192, %v585, 0
  %588 = vmatprep.subr.mxu0 0.0
  %589 = vmatpush1.msra.mxu0 %v182
  %590 = vmatprep.subr.mxu0 0.0
  %591 = vmatpush1.msra.mxu0 %v183
  %592 = vmatprep.subr.mxu0 0.0
  %593 = vmatpush1.msra.mxu0 %v184
  %594 = vmatprep.subr.mxu0 0.0
  %595 = vmatpush1.msra.mxu0 %v185
  %596 = vmatprep.subr.mxu0 0.0
  %597 = vmatpush1.msra.mxu0 0.0
  %598 = vmatprep.subr.mxu0 0.0
  %599 = vmatpush1.msra.mxu0 0.0
  %600 = vmatprep.subr.mxu0 0.0
  %601 = vmatpush1.msra.mxu0 0.0
  %602 = vmatprep.subr.mxu0 0.0
  %603 = vmatpush1.msra.mxu0 0.0
  %604 = vmatprep.subr.mxu0 0.0
  %605 = vmatpush1.msra.mxu0 0.0
  %606 = vmatprep.subr.mxu0 0.0
  %607 = vmatpush1.msra.mxu0 0.0
  %608 = vmatprep.subr.mxu0 0.0
  %609 = vmatpush1.msra.mxu0 0.0
  %610 = vmatprep.subr.mxu0 0.0
  %611 = vmatpush1.msra.mxu0 0.0
  %612 = vmatprep.subr.mxu0 0.0
  %613 = vmatpush1.msra.mxu0 0.0
  %614 = vmatprep.subr.mxu0 0.0
  %615 = vmatpush1.msra.mxu0 0.0
  %616 = vmatprep.subr.mxu0 0.0
  %617 = vmatpush1.msra.mxu0 0.0
  %618 = vmatprep.subr.mxu0 0.0
  %619 = vmatpush1.msra.mxu0 0.0
  %620 = vmatprep.subr.mxu0 0.0
  %621 = vmatpush1.msra.mxu0 0.0
  %622 = vmatprep.subr.mxu0 0.0
  %623 = vmatpush1.msra.mxu0 0.0
  %624 = vmatprep.subr.mxu0 0.0
  %625 = vmatpush1.msra.mxu0 0.0
  %626 = vmatprep.subr.mxu0 0.0
  %627 = vmatpush1.msra.mxu0 0.0
  %628 = vmatprep.subr.mxu0 0.0
  %629 = vmatpush1.msra.mxu0 0.0
  %630 = vmatprep.subr.mxu0 0.0
  %631 = vmatpush1.msra.mxu0 0.0
  %632 = vmatprep.subr.mxu0 0.0
  %633 = vmatpush1.msra.mxu0 0.0
  %634 = vmatprep.subr.mxu0 0.0
  %635 = vmatpush1.msra.mxu0 0.0
  %636 = vmatprep.subr.mxu0 0.0
  %637 = vmatpush1.msra.mxu0 0.0
  %638 = vmatprep.subr.mxu0 0.0
  %639 = vmatpush1.msra.mxu0 0.0
  %640 = vmatprep.subr.mxu0 0.0
  %641 = vmatpush1.msra.mxu0 0.0
  %642 = vmatprep.subr.mxu0 0.0
  %643 = vmatpush1.msra.mxu0 0.0
  %644 = vmatprep.subr.mxu0 0.0
  %645 = vmatpush1.msra.mxu0 0.0
  %646 = vmatprep.subr.mxu0 0.0
  %647 = vmatpush1.msra.mxu0 0.0
  %648 = vmatprep.subr.mxu0 0.0
  %649 = vmatpush1.msra.mxu0 0.0
  %650 = vmatprep.subr.mxu0 0.0
  %651 = vmatpush1.msra.mxu0 0.0
  %652 = vmatprep.mubr.f32.mxu0 0.0
  %653 = vmatmul.mubr.f32.gmra.mrb[0].mxu0 %v586
  %v654 = vpop.f32.mrb[0].mxu0
  %v655 = vadd.f32 0.0, %v654
  %v656 = vpop.f32.mrb[0].mxu0
  %657 = vdwg.mxu0
  %v658 = vadd.f32 %v582, %v655
  %v659 = vtanh.pop %v658
  %v660 = vmul.f32 %v659, %v189
  %v661 = vadd.f32 %v660, %v190
  %v662 = vmul.f32 %v661, %v574
  %664 = vrot.lane.b32.xlu0 %v661, 32
  %v665 = vpop.permute.xlu0 %664
  %v667 = vmul.f32 %v661, %v665
  %669 = vrot.lane.b32.xlu0 %v667, 32
  %v670 = vpop.permute.xlu0 %669
  %v672 = vadd.f32 %v662, %v670
  %v673 = vtanh.pop %v672
  %675 = vrot.lane.b32.xlu0 %v673, 32
  %v676 = vpop.permute.xlu0 %675
  %v678 = vmul.f32 %v661, %v676
  %s679 = scalar_lea.vmem [#allocation2], 40
  %v680 = vld [vmem:[%s679] sm:$0xff]
  %682 = vrot.lane.b32.xlu0 %v678, 64
  %v683 = vpop.permute.xlu0 %682
  %v684 = vsel %vm192, %v683, 0
  %686 = vmatprep.subr.mxu0 0.0
  %687 = vmatpush1.msra.mxu0 %v182
  %688 = vmatprep.subr.mxu0 0.0
  %689 = vmatpush1.msra.mxu0 %v183
  %690 = vmatprep.subr.mxu0 0.0
  %691 = vmatpush1.msra.mxu0 %v184
  %692 = vmatprep.subr.mxu0 0.0
  %693 = vmatpush1.msra.mxu0 %v185
  %694 = vmatprep.subr.mxu0 0.0
  %695 = vmatpush1.msra.mxu0 0.0
  %696 = vmatprep.subr.mxu0 0.0
  %697 = vmatpush1.msra.mxu0 0.0
  %698 = vmatprep.subr.mxu0 0.0
  %699 = vmatpush1.msra.mxu0 0.0
  %700 = vmatprep.subr.mxu0 0.0
  %701 = vmatpush1.msra.mxu0 0.0
  %702 = vmatprep.subr.mxu0 0.0
  %703 = vmatpush1.msra.mxu0 0.0
  %704 = vmatprep.subr.mxu0 0.0
  %705 = vmatpush1.msra.mxu0 0.0
  %706 = vmatprep.subr.mxu0 0.0
  %707 = vmatpush1.msra.mxu0 0.0
  %708 = vmatprep.subr.mxu0 0.0
  %709 = vmatpush1.msra.mxu0 0.0
  %710 = vmatprep.subr.mxu0 0.0
  %711 = vmatpush1.msra.mxu0 0.0
  %712 = vmatprep.subr.mxu0 0.0
  %713 = vmatpush1.msra.mxu0 0.0
  %714 = vmatprep.subr.mxu0 0.0
  %715 = vmatpush1.msra.mxu0 0.0
  %716 = vmatprep.subr.mxu0 0.0
  %717 = vmatpush1.msra.mxu0 0.0
  %718 = vmatprep.subr.mxu0 0.0
  %719 = vmatpush1.msra.mxu0 0.0
  %720 = vmatprep.subr.mxu0 0.0
  %721 = vmatpush1.msra.mxu0 0.0
  %722 = vmatprep.subr.mxu0 0.0
  %723 = vmatpush1.msra.mxu0 0.0
  %724 = vmatprep.subr.mxu0 0.0
  %725 = vmatpush1.msra.mxu0 0.0
  %726 = vmatprep.subr.mxu0 0.0
  %727 = vmatpush1.msra.mxu0 0.0
  %728 = vmatprep.subr.mxu0 0.0
  %729 = vmatpush1.msra.mxu0 0.0
  %730 = vmatprep.subr.mxu0 0.0
  %731 = vmatpush1.msra.mxu0 0.0
  %732 = vmatprep.subr.mxu0 0.0
  %733 = vmatpush1.msra.mxu0 0.0
  %734 = vmatprep.subr.mxu0 0.0
  %735 = vmatpush1.msra.mxu0 0.0
  %736 = vmatprep.subr.mxu0 0.0
  %737 = vmatpush1.msra.mxu0 0.0
  %738 = vmatprep.subr.mxu0 0.0
  %739 = vmatpush1.msra.mxu0 0.0
  %740 = vmatprep.subr.mxu0 0.0
  %741 = vmatpush1.msra.mxu0 0.0
  %742 = vmatprep.subr.mxu0 0.0
  %743 = vmatpush1.msra.mxu0 0.0
  %744 = vmatprep.subr.mxu0 0.0
  %745 = vmatpush1.msra.mxu0 0.0
  %746 = vmatprep.subr.mxu0 0.0
  %747 = vmatpush1.msra.mxu0 0.0
  %748 = vmatprep.subr.mxu0 0.0
  %749 = vmatpush1.msra.mxu0 0.0
  %750 = vmatprep.mubr.f32.mxu0 0.0
  %751 = vmatmul.mubr.f32.gmra.mrb[0].mxu0 %v684
  %v752 = vpop.f32.mrb[0].mxu0
  %v753 = vadd.f32 0.0, %v752
  %v754 = vpop.f32.mrb[0].mxu0
  %755 = vdwg.mxu0
  %v756 = vadd.f32 %v680, %v753
  %v757 = vtanh.pop %v756
  %v758 = vmul.f32 %v757, %v189
  %v759 = vadd.f32 %v758, %v190
  %v760 = vmul.f32 %v759, %v672
  %762 = vrot.lane.b32.xlu0 %v759, 32
  %v763 = vpop.permute.xlu0 %762
  %v765 = vmul.f32 %v759, %v763
  %767 = vrot.lane.b32.xlu0 %v765, 32
  %v768 = vpop.permute.xlu0 %767
  %v770 = vadd.f32 %v760, %v768
  %v771 = vtanh.pop %v770
  %773 = vrot.lane.b32.xlu0 %v771, 32
  %v774 = vpop.permute.xlu0 %773
  %v776 = vmul.f32 %v759, %v774
  %s777 = scalar_lea.vmem [#allocation2], 48
  %v778 = vld [vmem:[%s777] sm:$0xff]
  %780 = vrot.lane.b32.xlu0 %v776, 64
  %v781 = vpop.permute.xlu0 %780
  %v782 = vsel %vm192, %v781, 0
  %784 = vmatprep.subr.mxu0 0.0
  %785 = vmatpush1.msra.mxu0 %v182
  %786 = vmatprep.subr.mxu0 0.0
  %787 = vmatpush1.msra.mxu0 %v183
  %788 = vmatprep.subr.mxu0 0.0
  %789 = vmatpush1.msra.mxu0 %v184
  %790 = vmatprep.subr.mxu0 0.0
  %791 = vmatpush1.msra.mxu0 %v185
  %792 = vmatprep.subr.mxu0 0.0
  %793 = vmatpush1.msra.mxu0 0.0
  %794 = vmatprep.subr.mxu0 0.0
  %795 = vmatpush1.msra.mxu0 0.0
  %796 = vmatprep.subr.mxu0 0.0
  %797 = vmatpush1.msra.mxu0 0.0
  %798 = vmatprep.subr.mxu0 0.0
  %799 = vmatpush1.msra.mxu0 0.0
  %800 = vmatprep.subr.mxu0 0.0
  %801 = vmatpush1.msra.mxu0 0.0
  %802 = vmatprep.subr.mxu0 0.0
  %803 = vmatpush1.msra.mxu0 0.0
  %804 = vmatprep.subr.mxu0 0.0
  %805 = vmatpush1.msra.mxu0 0.0
  %806 = vmatprep.subr.mxu0 0.0
  %807 = vmatpush1.msra.mxu0 0.0
  %808 = vmatprep.subr.mxu0 0.0
  %809 = vmatpush1.msra.mxu0 0.0
  %810 = vmatprep.subr.mxu0 0.0
  %811 = vmatpush1.msra.mxu0 0.0
  %812 = vmatprep.subr.mxu0 0.0
  %813 = vmatpush1.msra.mxu0 0.0
  %814 = vmatprep.subr.mxu0 0.0
  %815 = vmatpush1.msra.mxu0 0.0
  %816 = vmatprep.subr.mxu0 0.0
  %817 = vmatpush1.msra.mxu0 0.0
  %818 = vmatprep.subr.mxu0 0.0
  %819 = vmatpush1.msra.mxu0 0.0
  %820 = vmatprep.subr.mxu0 0.0
  %821 = vmatpush1.msra.mxu0 0.0
  %822 = vmatprep.subr.mxu0 0.0
  %823 = vmatpush1.msra.mxu0 0.0
  %824 = vmatprep.subr.mxu0 0.0
  %825 = vmatpush1.msra.mxu0 0.0
  %826 = vmatprep.subr.mxu0 0.0
  %827 = vmatpush1.msra.mxu0 0.0
  %828 = vmatprep.subr.mxu0 0.0
  %829 = vmatpush1.msra.mxu0 0.0
  %830 = vmatprep.subr.mxu0 0.0
  %831 = vmatpush1.msra.mxu0 0.0
  %832 = vmatprep.subr.mxu0 0.0
  %833 = vmatpush1.msra.mxu0 0.0
  %834 = vmatprep.subr.mxu0 0.0
  %835 = vmatpush1.msra.mxu0 0.0
  %836 = vmatprep.subr.mxu0 0.0
  %837 = vmatpush1.msra.mxu0 0.0
  %838 = vmatprep.subr.mxu0 0.0
  %839 = vmatpush1.msra.mxu0 0.0
  %840 = vmatprep.subr.mxu0 0.0
  %841 = vmatpush1.msra.mxu0 0.0
  %842 = vmatprep.subr.mxu0 0.0
  %843 = vmatpush1.msra.mxu0 0.0
  %844 = vmatprep.subr.mxu0 0.0
  %845 = vmatpush1.msra.mxu0 0.0
  %846 = vmatprep.subr.mxu0 0.0
  %847 = vmatpush1.msra.mxu0 0.0
  %848 = vmatprep.mubr.f32.mxu0 0.0
  %849 = vmatmul.mubr.f32.gmra.mrb[0].mxu0 %v782
  %v850 = vpop.f32.mrb[0].mxu0
  %v851 = vadd.f32 0.0, %v850
  %v852 = vpop.f32.mrb[0].mxu0
  %853 = vdwg.mxu0
  %v854 = vadd.f32 %v778, %v851
  %v855 = vtanh.pop %v854
  %v856 = vmul.f32 %v855, %v189
  %v857 = vadd.f32 %v856, %v190
  %v858 = vmul.f32 %v857, %v770
  %860 = vrot.lane.b32.xlu0 %v857, 32
  %v861 = vpop.permute.xlu0 %860
  %v863 = vmul.f32 %v857, %v861
  %865 = vrot.lane.b32.xlu0 %v863, 32
  %v866 = vpop.permute.xlu0 %865
  %v868 = vadd.f32 %v858, %v866
  %v869 = vtanh.pop %v868
  %871 = vrot.lane.b32.xlu0 %v869, 32
  %v872 = vpop.permute.xlu0 %871
  %v874 = vmul.f32 %v857, %v872
  %s875 = scalar_lea.vmem [#allocation2], 56
  %v876 = vld [vmem:[%s875] sm:$0xff]
  %878 = vrot.lane.b32.xlu0 %v874, 64
  %v879 = vpop.permute.xlu0 %878
  %v880 = vsel %vm192, %v879, 0
  %882 = vmatprep.subr.mxu0 0.0
  %883 = vmatpush1.msra.mxu0 %v182
  %884 = vmatprep.subr.mxu0 0.0
  %885 = vmatpush1.msra.mxu0 %v183
  %886 = vmatprep.subr.mxu0 0.0
  %887 = vmatpush1.msra.mxu0 %v184
  %888 = vmatprep.subr.mxu0 0.0
  %889 = vmatpush1.msra.mxu0 %v185
  %890 = vmatprep.subr.mxu0 0.0
  %891 = vmatpush1.msra.mxu0 0.0
  %892 = vmatprep.subr.mxu0 0.0
  %893 = vmatpush1.msra.mxu0 0.0
  %894 = vmatprep.subr.mxu0 0.0
  %895 = vmatpush1.msra.mxu0 0.0
  %896 = vmatprep.subr.mxu0 0.0
  %897 = vmatpush1.msra.mxu0 0.0
  %898 = vmatprep.subr.mxu0 0.0
  %899 = vmatpush1.msra.mxu0 0.0
  %900 = vmatprep.subr.mxu0 0.0
  %901 = vmatpush1.msra.mxu0 0.0
  %902 = vmatprep.subr.mxu0 0.0
  %903 = vmatpush1.msra.mxu0 0.0
  %904 = vmatprep.subr.mxu0 0.0
  %905 = vmatpush1.msra.mxu0 0.0
  %906 = vmatprep.subr.mxu0 0.0
  %907 = vmatpush1.msra.mxu0 0.0
  %908 = vmatprep.subr.mxu0 0.0
  %909 = vmatpush1.msra.mxu0 0.0
  %910 = vmatprep.subr.mxu0 0.0
  %911 = vmatpush1.msra.mxu0 0.0
  %912 = vmatprep.subr.mxu0 0.0
  %913 = vmatpush1.msra.mxu0 0.0
  %914 = vmatprep.subr.mxu0 0.0
  %915 = vmatpush1.msra.mxu0 0.0
  %916 = vmatprep.subr.mxu0 0.0
  %917 = vmatpush1.msra.mxu0 0.0
  %918 = vmatprep.subr.mxu0 0.0
  %919 = vmatpush1.msra.mxu0 0.0
  %920 = vmatprep.subr.mxu0 0.0
  %921 = vmatpush1.msra.mxu0 0.0
  %922 = vmatprep.subr.mxu0 0.0
  %923 = vmatpush1.msra.mxu0 0.0
  %924 = vmatprep.subr.mxu0 0.0
  %925 = vmatpush1.msra.mxu0 0.0
  %926 = vmatprep.subr.mxu0 0.0
  %927 = vmatpush1.msra.mxu0 0.0
  %928 = vmatprep.subr.mxu0 0.0
  %929 = vmatpush1.msra.mxu0 0.0
  %930 = vmatprep.subr.mxu0 0.0
  %931 = vmatpush1.msra.mxu0 0.0
  %932 = vmatprep.subr.mxu0 0.0
  %933 = vmatpush1.msra.mxu0 0.0
  %934 = vmatprep.subr.mxu0 0.0
  %935 = vmatpush1.msra.mxu0 0.0
  %936 = vmatprep.subr.mxu0 0.0
  %937 = vmatpush1.msra.mxu0 0.0
  %938 = vmatprep.subr.mxu0 0.0
  %939 = vmatpush1.msra.mxu0 0.0
  %940 = vmatprep.subr.mxu0 0.0
  %941 = vmatpush1.msra.mxu0 0.0
  %942 = vmatprep.subr.mxu0 0.0
  %943 = vmatpush1.msra.mxu0 0.0
  %944 = vmatprep.subr.mxu0 0.0
  %945 = vmatpush1.msra.mxu0 0.0
  %946 = vmatprep.mubr.f32.mxu0 0.0
  %947 = vmatmul.mubr.f32.gmra.mrb[0].mxu0 %v880
  %v948 = vpop.f32.mrb[0].mxu0
  %v949 = vadd.f32 0.0, %v948
  %v950 = vpop.f32.mrb[0].mxu0
  %951 = vdwg.mxu0
  %v952 = vadd.f32 %v876, %v949
  %v953 = vtanh.pop %v952
  %v954 = vmul.f32 %v953, %v189
  %v955 = vadd.f32 %v954, %v190
  %v956 = vmul.f32 %v955, %v868
  %958 = vrot.lane.b32.xlu0 %v955, 32
  %v959 = vpop.permute.xlu0 %958
  %v961 = vmul.f32 %v955, %v959
  %963 = vrot.lane.b32.xlu0 %v961, 32
  %v964 = vpop.permute.xlu0 %963
  %v966 = vadd.f32 %v956, %v964
  %v967 = vtanh.pop %v966
  %969 = vrot.lane.b32.xlu0 %v967, 32
  %v970 = vpop.permute.xlu0 %969
  %v972 = vmul.f32 %v955, %v970
  %v973 = vld [vmem:[%s4] sm:$0x1]
  %s974 = sld [smem:[#allocation3]]
  %v975 = vstv %s974
  %977 = vrot.lane.b32.xlu0 %v972, 64
  %v978 = vpop.permute.xlu0 %977
  %v980 = vsel %vm192, %v973, 0
  %v982 = vsel %vm192, %v978, 0
  %984 = vmatprep.subr.mxu0 0.0
  %985 = vmatpush1.xpose.msra.mxu0 %v982
  %986 = vmatprep.subr.mxu0 0.0
  %987 = vmatpush1.xpose.msra.mxu0 0.0
  %988 = vmatprep.subr.mxu0 0.0
  %989 = vmatpush1.xpose.msra.mxu0 0.0
  %990 = vmatprep.subr.mxu0 0.0
  %991 = vmatpush1.xpose.msra.mxu0 0.0
  %992 = vmatprep.subr.mxu0 0.0
  %993 = vmatpush1.xpose.msra.mxu0 0.0
  %994 = vmatprep.subr.mxu0 0.0
  %995 = vmatpush1.xpose.msra.mxu0 0.0
  %996 = vmatprep.subr.mxu0 0.0
  %997 = vmatpush1.xpose.msra.mxu0 0.0
  %998 = vmatprep.subr.mxu0 0.0
  %999 = vmatpush1.xpose.msra.mxu0 0.0
  %1000 = vmatprep.subr.mxu0 0.0
  %1001 = vmatpush1.xpose.msra.mxu0 0.0
  %1002 = vmatprep.subr.mxu0 0.0
  %1003 = vmatpush1.xpose.msra.mxu0 0.0
  %1004 = vmatprep.subr.mxu0 0.0
  %1005 = vmatpush1.xpose.msra.mxu0 0.0
  %1006 = vmatprep.subr.mxu0 0.0
  %1007 = vmatpush1.xpose.msra.mxu0 0.0
  %1008 = vmatprep.subr.mxu0 0.0
  %1009 = vmatpush1.xpose.msra.mxu0 0.0
  %1010 = vmatprep.subr.mxu0 0.0
  %1011 = vmatpush1.xpose.msra.mxu0 0.0
  %1012 = vmatprep.subr.mxu0 0.0
  %1013 = vmatpush1.xpose.msra.mxu0 0.0
  %1014 = vmatprep.subr.mxu0 0.0
  %1015 = vmatpush1.xpose.msra.mxu0 0.0
  %1016 = vmatprep.subr.mxu0 0.0
  %1017 = vmatpush1.xpose.msra.mxu0 0.0
  %1018 = vmatprep.subr.mxu0 0.0
  %1019 = vmatpush1.xpose.msra.mxu0 0.0
  %1020 = vmatprep.subr.mxu0 0.0
  %1021 = vmatpush1.xpose.msra.mxu0 0.0
  %1022 = vmatprep.subr.mxu0 0.0
  %1023 = vmatpush1.xpose.msra.mxu0 0.0
  %1024 = vmatprep.subr.mxu0 0.0
  %1025 = vmatpush1.xpose.msra.mxu0 0.0
  %1026 = vmatprep.subr.mxu0 0.0
  %1027 = vmatpush1.xpose.msra.mxu0 0.0
  %1028 = vmatprep.subr.mxu0 0.0
  %1029 = vmatpush1.xpose.msra.mxu0 0.0
  %1030 = vmatprep.subr.mxu0 0.0
  %1031 = vmatpush1.xpose.msra.mxu0 0.0
  %1032 = vmatprep.subr.mxu0 0.0
  %1033 = vmatpush1.xpose.msra.mxu0 0.0
  %1034 = vmatprep.subr.mxu0 0.0
  %1035 = vmatpush1.xpose.msra.mxu0 0.0
  %1036 = vmatprep.subr.mxu0 0.0
  %1037 = vmatpush1.xpose.msra.mxu0 0.0
  %1038 = vmatprep.subr.mxu0 0.0
  %1039 = vmatpush1.xpose.msra.mxu0 0.0
  %1040 = vmatprep.subr.mxu0 0.0
  %1041 = vmatpush1.xpose.msra.mxu0 0.0
  %1042 = vmatprep.subr.mxu0 0.0
  %1043 = vmatpush1.xpose.msra.mxu0 0.0
  %1044 = vmatprep.subr.mxu0 0.0
  %1045 = vmatpush1.xpose.msra.mxu0 0.0
  %1046 = vmatprep.subr.mxu0 0.0
  %1047 = vmatpush1.xpose.msra.mxu0 0.0
  %1048 = vmatprep.mubr.f32.mxu0 0.0
  %1049 = vmatmul.mubr.f32.gmra.mrb[0].mxu0 %v980
  %v1050 = vpop.f32.mrb[0].mxu0
  %v1051 = vadd.f32 %v975, %v1050
  %v1052 = vpop.f32.mrb[0].mxu0
  %1053 = vdwg.mxu0
  %vm1054 = vcmask 57344
  %1055 = vst.msk [vmem:[%s6] sm:$0x1] %vm1054, %v1051
  // Predicated region
  $region26: #{lstm_model_forward.1} parent=0 // pred_check
    _
  $region27: #{lstm_model_forward.1} parent=0 // pred_check_branch
    %1057 = sbr.rel (0) target = $region29
  $region28: #{lstm_model_forward.1} parent=0 // pred_region
    _
  $region29: #{lstm_model_forward.1} parent=0 // pred_fallthru
    _
  // Predicated region
  $region30: #{lstm_model_forward.1} parent=0 // pred_check
    _
  $region31: #{lstm_model_forward.1} parent=0 // pred_check_branch
    %1059 = sbr.rel (0) target = $region33
  $region32: #{lstm_model_forward.1} parent=0 // pred_region
    _
  $region33: #{lstm_model_forward.1} parent=0 // pred_fallthru
    _

</llo_original>
